<compile_context>
chip_gen: v7x
topology: tpu7x:2x2x1
jax: 0.10.0
libtpu: 0.0.40
codegen_flags: <defaults>
</compile_context>

<pallas_src>
import math
import jax
import jax.numpy as jnp
from jax.experimental import pallas as pl
from jax.experimental.pallas import tpu as pltpu


# ---------------------------------------------------------------------------
# Synthetic config (stands in for `cfg`), small shapes.
# ---------------------------------------------------------------------------
FPN_CHANNELS = 4          # cfg.fpn_channels
ROIALIGN_SIZE = 4         # cfg.roialign_size
HEAD_BASE_CHANNELS = 32   # cfg.head_base_channels
NUM_CLASSES = 4           # cfg.num_classes

IN_CHANNELS = FPN_CHANNELS * ROIALIGN_SIZE ** 2   # 64
CLS_OUT = NUM_CLASSES + 1                         # 5
REG_OUT = NUM_CLASSES * 4                         # 16

# Lane-dense padded dims (multiples of 128) for hidden / fused-head output.
HID_PAD = 128
OUT_PAD = 128


def _pad2(a, rows, cols):
    """Zero-pad a 2D array up to (rows, cols)."""
    r, c = a.shape
    return jnp.pad(a, ((0, rows - r), (0, cols - c)))


# ---------------------------------------------------------------------------
# One-time parameter packing (done at init, NOT per forward call):
#   * weights zero-padded to lane-dense 128-wide tiles, cast to bf16
#   * fc_cls / fc_reg fused into ONE [HID_PAD, 128] weight: [Wc | Wr | 0]
#   * biases kept f32 (accuracy; VPU adds are cheap)
# Only the K (input) dim of W1 is left unpadded (64) — the MXU pads K
# internally and this avoids having to lane-pad x.
# ---------------------------------------------------------------------------
def pack_params(params):
    wh = jnp.concatenate([params["wc"], params["wr"]], axis=1)   # (32, 21)
    bh = jnp.concatenate([params["bc"], params["br"]], axis=1)   # (1, 21)
    return {
        "w1": _pad2(params["w1"], IN_CHANNELS, HID_PAD).astype(jnp.bfloat16),
        "b1": _pad2(params["b1"], 1, HID_PAD).astype(jnp.float32),
        "w2": _pad2(params["w2"], HID_PAD, HID_PAD).astype(jnp.bfloat16),
        "b2": _pad2(params["b2"], 1, HID_PAD).astype(jnp.float32),
        "wh": _pad2(wh, HID_PAD, OUT_PAD).astype(jnp.bfloat16),
        "bh": _pad2(bh, 1, OUT_PAD).astype(jnp.float32),
    }


# ---------------------------------------------------------------------------
# Pallas kernel: fused box-head MLP
#   h1  = relu(x @ W1 + b1)            (bf16 matmul, f32 accumulate)
#   h2  = relu(h1 @ W2 + b2)
#   out = h2 @ [Wc | Wr | 0] + [bc | br | 0]   (single lane-dense bf16 store)
# ---------------------------------------------------------------------------
def _head_kernel(x_ref, w1_ref, b1_ref, w2_ref, b2_ref, wh_ref, bh_ref,
                 out_ref):
    # In-kernel f32 -> bf16 cast (no wrapper-side padded bf16 copy of x).
    x = x_ref[...].astype(jnp.bfloat16)

    h1 = jnp.dot(x, w1_ref[...], preferred_element_type=jnp.float32)
    h1 = jnp.maximum(h1 + b1_ref[...], 0.0)

    h2 = jnp.dot(h1.astype(w2_ref.dtype), w2_ref[...],
                 preferred_element_type=jnp.float32)
    h2 = jnp.maximum(h2 + b2_ref[...], 0.0)

    out = jnp.dot(h2.astype(wh_ref.dtype), wh_ref[...],
                  preferred_element_type=jnp.float32) + bh_ref[...]
    out_ref[...] = out.astype(out_ref.dtype)


def faster_rcnn_head(roi_feats, packed, *, tile_rows=128):
    """Box-head forward.

    roi_feats: [N_roi, fpn_channels, roialign_size, roialign_size] (NCHW), f32.
    packed:    output of pack_params() (pre-padded / pre-cast weights).
    Returns (cls_pred [N_roi, NUM_CLASSES+1], reg_pred [N_roi, NUM_CLASSES*4]),
    both bfloat16 (accumulation inside the kernel is f32).
    """
    n_roi = roi_feats.shape[0]

    # Same flattening as torch's .flatten(1) on NCHW.
    x = roi_feats.reshape(n_roi, -1)

    # Only the row count is padded (padded rows sliced off below); the 64-wide
    # feature dim is fed as-is (block last dim == full array dim is legal).
    if n_roi <= tile_rows:
        tile_rows = max(8, -(-n_roi // 8) * 8)      # single tile, 8-aligned
    n_pad = -(-n_roi // tile_rows) * tile_rows
    if n_pad != n_roi:
        x = jnp.pad(x, ((0, n_pad - n_roi), (0, 0)))

    grid = (n_pad // tile_rows,)

    def row_map(i):
        return (i, 0)

    def full_map(i):
        return (0, 0)

    # Advisory cost hint so XLA overlaps neighbours with this short kernel.
    flops = 2 * n_pad * (IN_CHANNELS * HID_PAD
                         + HID_PAD * HID_PAD
                         + HID_PAD * OUT_PAD)
    bytes_accessed = (
        n_pad * IN_CHANNELS * 4                                        # x (f32)
        + 2 * (IN_CHANNELS * HID_PAD + HID_PAD * HID_PAD
               + HID_PAD * OUT_PAD)                                    # bf16 W
        + 4 * (2 * HID_PAD + OUT_PAD)                                  # f32 b
        + n_pad * OUT_PAD * 2)                                         # bf16 out

    out = pl.pallas_call(
        _head_kernel,
        out_shape=jax.ShapeDtypeStruct((n_pad, OUT_PAD), jnp.bfloat16),
        grid_spec=pltpu.PrefetchScalarGridSpec(
            num_scalar_prefetch=0,
            grid=grid,
            in_specs=[
                pl.BlockSpec((tile_rows, IN_CHANNELS), row_map),  # x (f32)
                pl.BlockSpec((IN_CHANNELS, HID_PAD), full_map),   # W1 (bf16)
                pl.BlockSpec((1, HID_PAD), full_map),             # b1 (f32)
                pl.BlockSpec((HID_PAD, HID_PAD), full_map),       # W2 (bf16)
                pl.BlockSpec((1, HID_PAD), full_map),             # b2 (f32)
                pl.BlockSpec((HID_PAD, OUT_PAD), full_map),       # [Wc|Wr|0]
                pl.BlockSpec((1, OUT_PAD), full_map),             # [bc|br|0]
            ],
            out_specs=pl.BlockSpec((tile_rows, OUT_PAD), row_map),
        ),
        compiler_params=pltpu.CompilerParams(
            dimension_semantics=("parallel",)),
        cost_estimate=pl.CostEstimate(
            flops=flops, transcendentals=0, bytes_accessed=bytes_accessed),
    )(x, packed["w1"], packed["b1"], packed["w2"], packed["b2"],
      packed["wh"], packed["bh"])

    cls_pred = out[:n_roi, :CLS_OUT]
    reg_pred = out[:n_roi, CLS_OUT:CLS_OUT + REG_OUT]
    return cls_pred, reg_pred


# ---------------------------------------------------------------------------
# Deterministic parameter init, mirroring the torch __init__:
#   shared_fc1 / shared_fc2 : xavier_uniform weight, zero bias
#   fc_cls : normal(std=0.01), zero bias
#   fc_reg : normal(std=0.001), zero bias
# Weights are stored pre-transposed to (in, out), so y = x @ W + b matches
# torch.nn.Linear's y = x @ W.T + b.
# ---------------------------------------------------------------------------
def init_params(key):
    k1, k2, k3, k4 = jax.random.split(key, 4)

    def xavier(k, fan_in, fan_out):
        bound = math.sqrt(6.0 / (fan_in + fan_out))
        return jax.random.uniform(k, (fan_in, fan_out), jnp.float32,
                                  minval=-bound, maxval=bound)

    return {
        "w1": xavier(k1, IN_CHANNELS, HEAD_BASE_CHANNELS),
        "b1": jnp.zeros((1, HEAD_BASE_CHANNELS), jnp.float32),
        "w2": xavier(k2, HEAD_BASE_CHANNELS, HEAD_BASE_CHANNELS),
        "b2": jnp.zeros((1, HEAD_BASE_CHANNELS), jnp.float32),
        "wc": 0.01 * jax.random.normal(k3, (HEAD_BASE_CHANNELS, CLS_OUT),
                                       jnp.float32),
        "bc": jnp.zeros((1, CLS_OUT), jnp.float32),
        "wr": 0.001 * jax.random.normal(k4, (HEAD_BASE_CHANNELS, REG_OUT),
                                        jnp.float32),
        "br": jnp.zeros((1, REG_OUT), jnp.float32),
    }


def _reference_head(roi_feats, params):
    """Pure-JAX f32 reference (torch semantics)."""
    x = roi_feats.reshape(roi_feats.shape[0], -1).astype(jnp.float32)
    h1 = jnp.maximum(x @ params["w1"] + params["b1"], 0.0)
    h2 = jnp.maximum(h1 @ params["w2"] + params["b2"], 0.0)
    return h2 @ params["wc"] + params["bc"], h2 @ params["wr"] + params["br"]


if __name__ == "__main__":
    key = jax.random.PRNGKey(0)
    pkey, xkey = jax.random.split(key)

    params = init_params(pkey)
    packed = pack_params(params)          # one-time packing, not per call

    # Synthetic RoIAligned features:
    # [N_roi, fpn_channels, roialign_size, roialign_size]
    n_roi = 512
    roi_feats = jax.random.normal(
        xkey, (n_roi, FPN_CHANNELS, ROIALIGN_SIZE, ROIALIGN_SIZE), jnp.float32)

    cls_pred, reg_pred = faster_rcnn_head(roi_feats, packed)
    cls_pred, reg_pred = jax.block_until_ready((cls_pred, reg_pred))

    ref_cls, ref_reg = _reference_head(roi_feats, params)
    assert cls_pred.shape == (n_roi, CLS_OUT)
    assert reg_pred.shape == (n_roi, REG_OUT)

    cls_f32 = cls_pred.astype(jnp.float32)
    reg_f32 = reg_pred.astype(jnp.float32)
    # bf16 operands + bf16 output, f32 accumulation -> loose-ish tolerance.
    assert jnp.allclose(cls_f32, ref_cls, atol=2e-2, rtol=2e-2), (
        float(jnp.max(jnp.abs(cls_f32 - ref_cls))))
    assert jnp.allclose(reg_f32, ref_reg, atol=2e-2, rtol=2e-2), (
        float(jnp.max(jnp.abs(reg_f32 - ref_reg))))

    print("KERNEL_OK")
</pallas_src>

<mosaic_0001>
module attributes {stable_mosaic.version = 11 : i64} {
  func.func @_head_kernel(%arg0: i32, %arg1: memref<128x64xf32, #tpu.memory_space<vmem>>, %arg2: memref<64x128xbf16, #tpu.memory_space<vmem>>, %arg3: memref<1x128xf32, #tpu.memory_space<vmem>>, %arg4: memref<128x128xbf16, #tpu.memory_space<vmem>>, %arg5: memref<1x128xf32, #tpu.memory_space<vmem>>, %arg6: memref<128x128xbf16, #tpu.memory_space<vmem>>, %arg7: memref<1x128xf32, #tpu.memory_space<vmem>>, %arg8: memref<128x128xbf16, #tpu.memory_space<vmem>>) attributes {dimension_semantics = [#tpu.dimension_semantics<parallel>], iteration_bounds = array<i64: 4>, scalar_prefetch = 0 : i64, scratch_operands = 0 : i64, tpu.core_type = #tpu.core_type<tc>, window_params = [{transform_indices = @transform_0, window_bounds = array<i64: 128, 64>}, {pipeline_mode = #tpu.pipeline_mode<synchronous>, transform_indices = @transform_1, window_bounds = array<i64: 64, 128>}, {pipeline_mode = #tpu.pipeline_mode<synchronous>, transform_indices = @transform_2, window_bounds = array<i64: 1, 128>}, {pipeline_mode = #tpu.pipeline_mode<synchronous>, transform_indices = @transform_3, window_bounds = array<i64: 128, 128>}, {pipeline_mode = #tpu.pipeline_mode<synchronous>, transform_indices = @transform_4, window_bounds = array<i64: 1, 128>}, {pipeline_mode = #tpu.pipeline_mode<synchronous>, transform_indices = @transform_5, window_bounds = array<i64: 128, 128>}, {pipeline_mode = #tpu.pipeline_mode<synchronous>, transform_indices = @transform_6, window_bounds = array<i64: 1, 128>}, {transform_indices = @transform_7, window_bounds = array<i64: 128, 128>}]} {
    %c0 = arith.constant 0 : index
    %c0_0 = arith.constant 0 : index
    %0 = vector.load %arg1[%c0, %c0_0] : memref<128x64xf32, #tpu.memory_space<vmem>>, vector<128x64xf32>
    %1 = arith.truncf %0 : vector<128x64xf32> to vector<128x64xbf16>
    %c0_1 = arith.constant 0 : index
    %c0_2 = arith.constant 0 : index
    %2 = vector.load %arg2[%c0_1, %c0_2] : memref<64x128xbf16, #tpu.memory_space<vmem>>, vector<64x128xbf16>
    %cst = arith.constant dense<0.000000e+00> : vector<128x128xf32>
    %3 = tpu.matmul %1, %2, %cst {dimension_numbers = #tpu.dot_dimension_numbers<[1], [0], [0], [1], [0, 0, 1, 1], [], []>} : vector<128x64xbf16>, vector<64x128xbf16>, vector<128x128xf32> -> vector<128x128xf32>
    %c0_3 = arith.constant 0 : index
    %c0_4 = arith.constant 0 : index
    %4 = vector.load %arg3[%c0_3, %c0_4] : memref<1x128xf32, #tpu.memory_space<vmem>>, vector<1x128xf32>
    %5 = vector.broadcast %4 : vector<1x128xf32> to vector<128x128xf32>
    %6 = arith.addf %3, %5 : vector<128x128xf32>
    %cst_5 = arith.constant 0.000000e+00 : f32
    %7 = vector.broadcast %cst_5 : f32 to vector<128x128xf32>
    %8 = arith.maximumf %6, %7 : vector<128x128xf32>
    %9 = arith.truncf %8 : vector<128x128xf32> to vector<128x128xbf16>
    %c0_6 = arith.constant 0 : index
    %c0_7 = arith.constant 0 : index
    %10 = vector.load %arg4[%c0_6, %c0_7] : memref<128x128xbf16, #tpu.memory_space<vmem>>, vector<128x128xbf16>
    %cst_8 = arith.constant dense<0.000000e+00> : vector<128x128xf32>
    %11 = tpu.matmul %9, %10, %cst_8 {dimension_numbers = #tpu.dot_dimension_numbers<[1], [0], [0], [1], [0, 0, 1, 1], [], []>} : vector<128x128xbf16>, vector<128x128xbf16>, vector<128x128xf32> -> vector<128x128xf32>
    %c0_9 = arith.constant 0 : index
    %c0_10 = arith.constant 0 : index
    %12 = vector.load %arg5[%c0_9, %c0_10] : memref<1x128xf32, #tpu.memory_space<vmem>>, vector<1x128xf32>
    %13 = vector.broadcast %12 : vector<1x128xf32> to vector<128x128xf32>
    %14 = arith.addf %11, %13 : vector<128x128xf32>
    %cst_11 = arith.constant 0.000000e+00 : f32
    %15 = vector.broadcast %cst_11 : f32 to vector<128x128xf32>
    %16 = arith.maximumf %14, %15 : vector<128x128xf32>
    %17 = arith.truncf %16 : vector<128x128xf32> to vector<128x128xbf16>
    %c0_12 = arith.constant 0 : index
    %c0_13 = arith.constant 0 : index
    %18 = vector.load %arg6[%c0_12, %c0_13] : memref<128x128xbf16, #tpu.memory_space<vmem>>, vector<128x128xbf16>
    %cst_14 = arith.constant dense<0.000000e+00> : vector<128x128xf32>
    %19 = tpu.matmul %17, %18, %cst_14 {dimension_numbers = #tpu.dot_dimension_numbers<[1], [0], [0], [1], [0, 0, 1, 1], [], []>} : vector<128x128xbf16>, vector<128x128xbf16>, vector<128x128xf32> -> vector<128x128xf32>
    %c0_15 = arith.constant 0 : index
    %c0_16 = arith.constant 0 : index
    %20 = vector.load %arg7[%c0_15, %c0_16] : memref<1x128xf32, #tpu.memory_space<vmem>>, vector<1x128xf32>
    %21 = vector.broadcast %20 : vector<1x128xf32> to vector<128x128xf32>
    %22 = arith.addf %19, %21 : vector<128x128xf32>
    %23 = arith.truncf %22 : vector<128x128xf32> to vector<128x128xbf16>
    %c0_17 = arith.constant 0 : index
    %c0_18 = arith.constant 0 : index
    %24 = vector.load %arg8[%c0_17, %c0_18] : memref<128x128xbf16, #tpu.memory_space<vmem>>, vector<128x128xbf16>
    tpu.vector_store %arg8[%c0_17, %c0_18], %23 {strides = array<i32>} : memref<128x128xbf16, #tpu.memory_space<vmem>>, vector<128x128xbf16>,
    return
  }
  func.func @transform_0(%arg0: i32) -> (i32, i32) {
    %c0_i32 = arith.constant 0 : i32
    %c0_i32_0 = arith.constant 0 : i32
    return %arg0, %c0_i32 : i32, i32
  }
  func.func @transform_1(%arg0: i32) -> (i32, i32) {
    %c0_i32 = arith.constant 0 : i32
    %c0_i32_0 = arith.constant 0 : i32
    %c0_i32_1 = arith.constant 0 : i32
    return %c0_i32, %c0_i32_0 : i32, i32
  }
  func.func @transform_2(%arg0: i32) -> (i32, i32) {
    %c0_i32 = arith.constant 0 : i32
    %c0_i32_0 = arith.constant 0 : i32
    %c0_i32_1 = arith.constant 0 : i32
    return %c0_i32, %c0_i32_0 : i32, i32
  }
  func.func @transform_3(%arg0: i32) -> (i32, i32) {
    %c0_i32 = arith.constant 0 : i32
    %c0_i32_0 = arith.constant 0 : i32
    %c0_i32_1 = arith.constant 0 : i32
    return %c0_i32, %c0_i32_0 : i32, i32
  }
  func.func @transform_4(%arg0: i32) -> (i32, i32) {
    %c0_i32 = arith.constant 0 : i32
    %c0_i32_0 = arith.constant 0 : i32
    %c0_i32_1 = arith.constant 0 : i32
    return %c0_i32, %c0_i32_0 : i32, i32
  }
  func.func @transform_5(%arg0: i32) -> (i32, i32) {
    %c0_i32 = arith.constant 0 : i32
    %c0_i32_0 = arith.constant 0 : i32
    %c0_i32_1 = arith.constant 0 : i32
    return %c0_i32, %c0_i32_0 : i32, i32
  }
  func.func @transform_6(%arg0: i32) -> (i32, i32) {
    %c0_i32 = arith.constant 0 : i32
    %c0_i32_0 = arith.constant 0 : i32
    %c0_i32_1 = arith.constant 0 : i32
    return %c0_i32, %c0_i32_0 : i32, i32
  }
  func.func @transform_7(%arg0: i32) -> (i32, i32) {
    %c0_i32 = arith.constant 0 : i32
    %c0_i32_0 = arith.constant 0 : i32
    return %arg0, %c0_i32 : i32, i32
  }
}

</mosaic_0001>

<llo_original>
// kernel: tpu_custom_call.1
$region0: #{tpu_custom_call.1}
  #allocation0 [shape = 'u32[]', space=smem, size = 0x4, offset = 0x4, fixed_abs, tag = 'smem constant byte address 0x4 - core index']
  #allocation1 [shape = 'u32[144,128]{1,0:T(1,128)}', space=vmem, size = 0x12000, scoped, tag = 'internal scratch']
  %s0 = inlined_call_operand.vmem [shape: f32[512,64], index: 0, kind: input, shape index: {}]
  %s1 = inlined_call_operand.vmem [shape: bf16[64,128], index: 1, kind: input, shape index: {}]
  %s2 = inlined_call_operand.vmem [shape: f32[1,128], index: 2, kind: input, shape index: {}]
  %s3 = inlined_call_operand.vmem [shape: bf16[128,128], index: 3, kind: input, shape index: {}]
  %s4 = inlined_call_operand.vmem [shape: f32[1,128], index: 4, kind: input, shape index: {}]
  %s5 = inlined_call_operand.vmem [shape: bf16[128,128], index: 5, kind: input, shape index: {}]
  %s6 = inlined_call_operand.vmem [shape: f32[1,128], index: 6, kind: input, shape index: {}]
  %s7 = inlined_call_operand.hbm [shape: bf16[512,128], index: 7, kind: output, shape index: {}]
  %s8 = sld [smem:[#allocation0]]
  $region61: #{tpu_custom_call.1} parent=0
    _
  %s10 = ssub.s32 1, %s8
  %s11 = scalar_select 0, %s10, %s8
  $region1: #{tpu_custom_call.1} parent=0
    #allocation2 [shape = 'u8[65536]{0}', space=vmem, size = 0x10000, scoped, tag = 'output window, operand 0']
    #allocation3 [shape = 's32[2]{0}', space=sflag, size = 0x8, scoped, tag = 'scoped memory for tpu_custom_call.1']
    %12 = vsyncpa [#allocation3], 0
    %s13 = scalar_lea.sflag [#allocation3], 1
    %14 = vsyncpa %s13, 0
    loop: start=0, step=1, limit=6
    $region2: #{tpu_custom_call.1} parent=1 // loop_pre_header
      _
    $region3: #{tpu_custom_call.1} parent=1 // loop_header
      %s16 = sphi 0, %s20
      %p17 = scmp.ge.s32.totalorder %s16, 6
      %s26 = sphi 0, %s28
      %s29 = sphi 0, %s26
      %s30 = sphi 0, %s29
      %s46 = sphi 0, %s30
      %s50 = sphi 0, %s50
      %s52 = sphi 0, %s50
      %s53 = sphi 0, %s52
      %s67 = sphi 0, %s53
      %s71 = sphi 0, %s71
      %s73 = sphi 0, %s71
      %s74 = sphi 0, %s73
      %s88 = sphi 0, %s74
      %s92 = sphi 0, %s92
      %s94 = sphi 0, %s92
      %s95 = sphi 0, %s94
      %s109 = sphi 0, %s95
      %s113 = sphi 0, %s113
      %s115 = sphi 0, %s113
      %s116 = sphi 0, %s115
      %s130 = sphi 0, %s116
      %s134 = sphi 0, %s134
      %s136 = sphi 0, %s134
      %s137 = sphi 0, %s136
      %s151 = sphi 0, %s137
      %s155 = sphi 0, %s155
      %s157 = sphi 0, %s155
      %s158 = sphi 0, %s157
      %s172 = sphi 0, %s158
      %s178 = sphi 0, %s180
      %s181 = sphi 0, %s178
      %s182 = sphi 0, %s181
      %s198 = sphi 0, %s182
    $region4: #{tpu_custom_call.1} parent=1 // loop_header_branch
      %19 = sbr.rel (%p17) target = $region8
    $region5: #{tpu_custom_call.1} parent=1 // loop_body
      %s21 = ssub.s32 %s16, 1
      %s22 = ssub.s32 %s16, 2
      %s23 = sadd.s32 %s16, 1
      %s24 = ssub.s32 %s16, %s23
      %p25 = scmp.eq.s32.totalorder %s24, 0
      %s27 = sadd.s32 %s26, 1
      %s28 = scalar_select %p25, %s26, %s27
      %p31 = pneg %p25
      %p32 = scmp.eq.s32.totalorder %s16, 3
      %p33 = por %p31, %p32
      %p34 = scmp.ne.s32.totalorder %s26, %s29
      %p35 = scmp.eq.s32.totalorder %s16, 0
      %p36 = por %p34, %p35
      %p37 = scmp.ne.s32.totalorder %s26, %s29
      %p38 = scmp.eq.s32.totalorder %s21, 3
      %p39 = por %p37, %p38
      %p40 = scmp.ne.s32.totalorder %s29, %s30
      %p41 = scmp.eq.s32.totalorder %s21, 0
      %p42 = por %p40, %p41
      %p43 = scmp.ne.s32.totalorder %s29, %s30
      %p44 = scmp.eq.s32.totalorder %s22, 3
      %p45 = por %p43, %p44
      %p47 = scmp.ne.s32.totalorder %s30, %s46
      %p48 = scmp.eq.s32.totalorder %s22, 0
      %p49 = por %p47, %p48
      %s51 = sadd.s32 %s50, 1
      %p54 = scmp.eq.s32.totalorder %s16, 3
      %p55 = scmp.ne.s32.totalorder %s50, %s52
      %p56 = scmp.eq.s32.totalorder %s16, 0
      %p57 = por %p55, %p56
      %p58 = scmp.ne.s32.totalorder %s50, %s52
      %p59 = scmp.eq.s32.totalorder %s21, 3
      %p60 = por %p58, %p59
      %p61 = scmp.ne.s32.totalorder %s52, %s53
      %p62 = scmp.eq.s32.totalorder %s21, 0
      %p63 = por %p61, %p62
      %p64 = scmp.ne.s32.totalorder %s52, %s53
      %p65 = scmp.eq.s32.totalorder %s22, 3
      %p66 = por %p64, %p65
      %p68 = scmp.ne.s32.totalorder %s53, %s67
      %p69 = scmp.eq.s32.totalorder %s22, 0
      %p70 = por %p68, %p69
      %s72 = sadd.s32 %s71, 1
      %p75 = scmp.eq.s32.totalorder %s16, 3
      %p76 = scmp.ne.s32.totalorder %s71, %s73
      %p77 = scmp.eq.s32.totalorder %s16, 0
      %p78 = por %p76, %p77
      %p79 = scmp.ne.s32.totalorder %s71, %s73
      %p80 = scmp.eq.s32.totalorder %s21, 3
      %p81 = por %p79, %p80
      %p82 = scmp.ne.s32.totalorder %s73, %s74
      %p83 = scmp.eq.s32.totalorder %s21, 0
      %p84 = por %p82, %p83
      %p85 = scmp.ne.s32.totalorder %s73, %s74
      %p86 = scmp.eq.s32.totalorder %s22, 3
      %p87 = por %p85, %p86
      %p89 = scmp.ne.s32.totalorder %s74, %s88
      %p90 = scmp.eq.s32.totalorder %s22, 0
      %p91 = por %p89, %p90
      %s93 = sadd.s32 %s92, 1
      %p96 = scmp.eq.s32.totalorder %s16, 3
      %p97 = scmp.ne.s32.totalorder %s92, %s94
      %p98 = scmp.eq.s32.totalorder %s16, 0
      %p99 = por %p97, %p98
      %p100 = scmp.ne.s32.totalorder %s92, %s94
      %p101 = scmp.eq.s32.totalorder %s21, 3
      %p102 = por %p100, %p101
      %p103 = scmp.ne.s32.totalorder %s94, %s95
      %p104 = scmp.eq.s32.totalorder %s21, 0
      %p105 = por %p103, %p104
      %p106 = scmp.ne.s32.totalorder %s94, %s95
      %p107 = scmp.eq.s32.totalorder %s22, 3
      %p108 = por %p106, %p107
      %p110 = scmp.ne.s32.totalorder %s95, %s109
      %p111 = scmp.eq.s32.totalorder %s22, 0
      %p112 = por %p110, %p111
      %s114 = sadd.s32 %s113, 1
      %p117 = scmp.eq.s32.totalorder %s16, 3
      %p118 = scmp.ne.s32.totalorder %s113, %s115
      %p119 = scmp.eq.s32.totalorder %s16, 0
      %p120 = por %p118, %p119
      %p121 = scmp.ne.s32.totalorder %s113, %s115
      %p122 = scmp.eq.s32.totalorder %s21, 3
      %p123 = por %p121, %p122
      %p124 = scmp.ne.s32.totalorder %s115, %s116
      %p125 = scmp.eq.s32.totalorder %s21, 0
      %p126 = por %p124, %p125
      %p127 = scmp.ne.s32.totalorder %s115, %s116
      %p128 = scmp.eq.s32.totalorder %s22, 3
      %p129 = por %p127, %p128
      %p131 = scmp.ne.s32.totalorder %s116, %s130
      %p132 = scmp.eq.s32.totalorder %s22, 0
      %p133 = por %p131, %p132
      %s135 = sadd.s32 %s134, 1
      %p138 = scmp.eq.s32.totalorder %s16, 3
      %p139 = scmp.ne.s32.totalorder %s134, %s136
      %p140 = scmp.eq.s32.totalorder %s16, 0
      %p141 = por %p139, %p140
      %p142 = scmp.ne.s32.totalorder %s134, %s136
      %p143 = scmp.eq.s32.totalorder %s21, 3
      %p144 = por %p142, %p143
      %p145 = scmp.ne.s32.totalorder %s136, %s137
      %p146 = scmp.eq.s32.totalorder %s21, 0
      %p147 = por %p145, %p146
      %p148 = scmp.ne.s32.totalorder %s136, %s137
      %p149 = scmp.eq.s32.totalorder %s22, 3
      %p150 = por %p148, %p149
      %p152 = scmp.ne.s32.totalorder %s137, %s151
      %p153 = scmp.eq.s32.totalorder %s22, 0
      %p154 = por %p152, %p153
      %s156 = sadd.s32 %s155, 1
      %p159 = scmp.eq.s32.totalorder %s16, 3
      %p160 = scmp.ne.s32.totalorder %s155, %s157
      %p161 = scmp.eq.s32.totalorder %s16, 0
      %p162 = por %p160, %p161
      %p163 = scmp.ne.s32.totalorder %s155, %s157
      %p164 = scmp.eq.s32.totalorder %s21, 3
      %p165 = por %p163, %p164
      %p166 = scmp.ne.s32.totalorder %s157, %s158
      %p167 = scmp.eq.s32.totalorder %s21, 0
      %p168 = por %p166, %p167
      %p169 = scmp.ne.s32.totalorder %s157, %s158
      %p170 = scmp.eq.s32.totalorder %s22, 3
      %p171 = por %p169, %p170
      %p173 = scmp.ne.s32.totalorder %s158, %s172
      %p174 = scmp.eq.s32.totalorder %s22, 0
      %p175 = por %p173, %p174
      %s176 = ssub.s32 %s16, %s23
      %p177 = scmp.eq.s32.totalorder %s176, 0
      %s179 = sadd.s32 %s178, 1
      %s180 = scalar_select %p177, %s178, %s179
      %p183 = pneg %p177
      %p184 = scmp.eq.s32.totalorder %s16, 3
      %p185 = por %p183, %p184
      %p186 = scmp.ne.s32.totalorder %s178, %s181
      %p187 = scmp.eq.s32.totalorder %s16, 0
      %p188 = por %p186, %p187
      %p189 = scmp.ne.s32.totalorder %s178, %s181
      %p190 = scmp.eq.s32.totalorder %s21, 3
      %p191 = por %p189, %p190
      %p192 = scmp.ne.s32.totalorder %s181, %s182
      %p193 = scmp.eq.s32.totalorder %s21, 0
      %p194 = por %p192, %p193
      %p195 = scmp.ne.s32.totalorder %s181, %s182
      %p196 = scmp.eq.s32.totalorder %s22, 3
      %p197 = por %p195, %p196
      %p199 = scmp.ne.s32.totalorder %s182, %s198
      %p200 = scmp.eq.s32.totalorder %s22, 0
      %p201 = por %p199, %p200
      %p202 = scmp.le.s32.totalorder 1, %s16
      %p203 = scmp.lt.s32.totalorder %s16, 5
      %p204 = pnand %p202, %p203
      %p205 = pneg %p204
      // Predicated region
      $region9: #{tpu_custom_call.1} parent=5 // pred_check
        _
      $region10: #{tpu_custom_call.1} parent=5 // pred_check_branch
        %207 = sbr.rel (%p204) target = $region12
      $region11: #{tpu_custom_call.1} parent=5 // pred_region
        %s208 = ssub.s32 %s16, 1
        // Predicated region
        $region13: #{tpu_custom_call.1} parent=11 // pred_check
          %p209 = pneg %p63
        $region14: #{tpu_custom_call.1} parent=11 // pred_check_branch
          %211 = sbr.rel (%p209) target = $region16
        $region15: #{tpu_custom_call.1} parent=11 // pred_region
          _
        $region16: #{tpu_custom_call.1} parent=11 // pred_fallthru
          _
        // Predicated region
        $region17: #{tpu_custom_call.1} parent=11 // pred_check
          %p212 = pneg %p84
        $region18: #{tpu_custom_call.1} parent=11 // pred_check_branch
          %214 = sbr.rel (%p212) target = $region20
        $region19: #{tpu_custom_call.1} parent=11 // pred_region
          _
        $region20: #{tpu_custom_call.1} parent=11 // pred_fallthru
          _
        // Predicated region
        $region21: #{tpu_custom_call.1} parent=11 // pred_check
          %p215 = pneg %p105
        $region22: #{tpu_custom_call.1} parent=11 // pred_check_branch
          %217 = sbr.rel (%p215) target = $region24
        $region23: #{tpu_custom_call.1} parent=11 // pred_region
          _
        $region24: #{tpu_custom_call.1} parent=11 // pred_fallthru
          _
        // Predicated region
        $region25: #{tpu_custom_call.1} parent=11 // pred_check
          %p218 = pneg %p126
        $region26: #{tpu_custom_call.1} parent=11 // pred_check_branch
          %220 = sbr.rel (%p218) target = $region28
        $region27: #{tpu_custom_call.1} parent=11 // pred_region
          _
        $region28: #{tpu_custom_call.1} parent=11 // pred_fallthru
          _
        // Predicated region
        $region29: #{tpu_custom_call.1} parent=11 // pred_check
          %p221 = pneg %p147
        $region30: #{tpu_custom_call.1} parent=11 // pred_check_branch
          %223 = sbr.rel (%p221) target = $region32
        $region31: #{tpu_custom_call.1} parent=11 // pred_region
          _
        $region32: #{tpu_custom_call.1} parent=11 // pred_fallthru
          _
        // Predicated region
        $region33: #{tpu_custom_call.1} parent=11 // pred_check
          %p224 = pneg %p168
        $region34: #{tpu_custom_call.1} parent=11 // pred_check_branch
          %226 = sbr.rel (%p224) target = $region36
        $region35: #{tpu_custom_call.1} parent=11 // pred_region
          _
        $region36: #{tpu_custom_call.1} parent=11 // pred_fallthru
          _
      $region12: #{tpu_custom_call.1} parent=5 // pred_fallthru
        _
      %p227 = scmp.lt.s32.totalorder %s16, 4
      // Predicated region
      $region37: #{tpu_custom_call.1} parent=5 // pred_check
        %p228 = pneg %p227
      $region38: #{tpu_custom_call.1} parent=5 // pred_check_branch
        %230 = sbr.rel (%p228) target = $region40
      $region39: #{tpu_custom_call.1} parent=5 // pred_region
        // Predicated region
        $region41: #{tpu_custom_call.1} parent=39 // pred_check
          %p231 = pneg %p36
        $region42: #{tpu_custom_call.1} parent=39 // pred_check_branch
          %233 = sbr.rel (%p231) target = $region44
        $region43: #{tpu_custom_call.1} parent=39 // pred_region
          %s234 = smul.u32 16, %s16
          %p235 = scmp.lt.s32.totalorder %s234, 63
          %s236 = scalar_select %p235, %s234, 63
          %s237 = smul.addr %s236, 8
          %s238 = scalar_lea.vmem %s0, %s237
          %s239 = smul.u32 16, %s16
        $region44: #{tpu_custom_call.1} parent=39 // pred_fallthru
          _
      $region40: #{tpu_custom_call.1} parent=5 // pred_fallthru
        _
      %p240 = scmp.le.s32.totalorder 1, %s16
      %p241 = scmp.lt.s32.totalorder %s16, 5
      %p242 = pnand %p240, %p241
      %p243 = pneg %p242
      // Predicated region
      $region45: #{tpu_custom_call.1} parent=5 // pred_check
        _
      $region46: #{tpu_custom_call.1} parent=5 // pred_check_branch
        %245 = sbr.rel (%p242) target = $region48
      $region47: #{tpu_custom_call.1} parent=5 // pred_region
        %s246 = ssub.s32 %s16, 1
        %s247 = smul.u32 16, %s21
        %p248 = scmp.lt.s32.totalorder %s247, 63
        %s249 = scalar_select %p248, %s247, 63
        %s250 = smul.addr %s249, 8
        %s251 = scalar_lea.vmem %s0, %s250
        %p252 = pneg %p42
        %p253 = pneg %p39
        %p254 = pneg %p63
        %p255 = pneg %p60
        %p256 = pneg %p84
        %p257 = pneg %p81
        %p258 = pneg %p105
        %p259 = pneg %p102
        %p260 = pneg %p126
        %p261 = pneg %p123
        %p262 = pneg %p147
        %p263 = pneg %p144
        %p264 = pneg %p168
        %p265 = pneg %p165
        %p266 = pneg %p194
        %p267 = pneg %p191
        %s268 = sand.u32 %s181, 1
        %s269 = scalar_lea.sflag [#allocation3], %s268
        %s270 = sand.u32 %s181, 1
        %s271 = smul.addr %s270, 64
        %s272 = scalar_lea.vmem [#allocation2], %s271
        %s273 = smul.u32 16, %s21
        %p274 = scmp.lt.s32.totalorder %s273, 63
        %s275 = scalar_select %p274, %s273, 63
        %s276 = smul.addr %s275, 8
        %s277 = scalar_lea.vmem %s0, %s276
        %s278 = smul.u32 16, %s21
        %s279 = smul.u32 16, %s21
        %v281 = vld [vmem:[%s277] sm:$0xff]
        %v282 = vld [vmem:[%s277 + $0x8] sm:$0xff]
        %v283 = vld [vmem:[%s277 + $0x10] sm:$0xff]
        %v284 = vld [vmem:[%s277 + $0x18] sm:$0xff]
        %v285 = vld [vmem:[%s277 + $0x20] sm:$0xff]
        %v286 = vld [vmem:[%s277 + $0x28] sm:$0xff]
        %v287 = vld [vmem:[%s277 + $0x30] sm:$0xff]
        %v288 = vld [vmem:[%s277 + $0x38] sm:$0xff]
        %v289 = vld [vmem:[%s277 + $0x40] sm:$0xff]
        %v290 = vld [vmem:[%s277 + $0x48] sm:$0xff]
        %v291 = vld [vmem:[%s277 + $0x50] sm:$0xff]
        %v292 = vld [vmem:[%s277 + $0x58] sm:$0xff]
        %v293 = vld [vmem:[%s277 + $0x60] sm:$0xff]
        %v294 = vld [vmem:[%s277 + $0x68] sm:$0xff]
        %v295 = vld [vmem:[%s277 + $0x70] sm:$0xff]
        %v296 = vld [vmem:[%s277 + $0x78] sm:$0xff]
        %v297 = vpack.c.bf16 %v282, %v281
        %v298 = vpack.c.bf16 %v284, %v283
        %v299 = vpack.c.bf16 %v286, %v285
        %v300 = vpack.c.bf16 %v288, %v287
        %v301 = vpack.c.bf16 %v290, %v289
        %v302 = vpack.c.bf16 %v292, %v291
        %v303 = vpack.c.bf16 %v294, %v293
        %v304 = vpack.c.bf16 %v296, %v295
        %v305 = vld [vmem:[%s1] sm:$0xf]
        %v306 = vld [vmem:[%s1 + $0x4] sm:$0xf]
        %v307 = vld [vmem:[%s1 + $0x8] sm:$0xf]
        %v308 = vld [vmem:[%s1 + $0xc] sm:$0xf]
        %v309 = vld [vmem:[%s1 + $0x10] sm:$0xf]
        %v310 = vld [vmem:[%s1 + $0x14] sm:$0xf]
        %v311 = vld [vmem:[%s1 + $0x18] sm:$0xf]
        %v312 = vld [vmem:[%s1 + $0x1c] sm:$0xf]
        %v313 = vld [vmem:[%s2] sm:$0x1]
        %v315 = vlaneseq
        %v316 = vshrl.u32 %v315, 7
        %v317 = vsub.s32 0, %v316
        %v318 = vrot.slane %v313, %v317
        %v328 = vunpack.c.l.b16 %v305
        %v329 = vunpack.c.l.b16 %v306
        %v330 = vunpack.c.l.b16 %v307
        %v331 = vunpack.c.l.b16 %v308
        %v332 = vunpack.c.l.b16 %v309
        %v333 = vunpack.c.l.b16 %v310
        %v334 = vunpack.c.l.b16 %v311
        %v335 = vunpack.c.l.b16 %v312
        %v336 = vpack.c.b16 %v329, %v328
        %v337 = vpack.c.b16 %v331, %v330
        %v338 = vpack.c.b16 %v333, %v332
        %v339 = vpack.c.b16 %v335, %v334
        %vm344 = vcmask 523264
        %v346 = vsel %vm344, %v297, 0
        %v349 = vsel %vm344, %v298, 0
        %v352 = vsel %vm344, %v299, 0
        %v355 = vsel %vm344, %v300, 0
        %v358 = vsel %vm344, %v301, 0
        %v361 = vsel %vm344, %v302, 0
        %v364 = vsel %vm344, %v303, 0
        %v367 = vsel %vm344, %v304, 0
        %369 = vmatprep.subr.bf16.mxu0 0
        %370 = vmatpush1.bf16.msra.mxu0 %v336
        %371 = vmatprep.subr.bf16.mxu0 0
        %372 = vmatpush1.bf16.msra.mxu0 %v337
        %373 = vmatprep.subr.bf16.mxu0 0
        %374 = vmatpush1.bf16.msra.mxu0 %v338
        %375 = vmatprep.subr.bf16.mxu0 0
        %376 = vmatpush1.bf16.msra.mxu0 %v339
        %377 = vmatprep.subr.bf16.mxu0 0
        %378 = vmatpush1.bf16.msra.mxu0 0
        %379 = vmatprep.subr.bf16.mxu0 0
        %380 = vmatpush1.bf16.msra.mxu0 0
        %381 = vmatprep.subr.bf16.mxu0 0
        %382 = vmatpush1.bf16.msra.mxu0 0
        %383 = vmatprep.subr.bf16.mxu0 0
        %384 = vmatpush1.bf16.msra.mxu0 0
        %385 = vmatprep.subr.bf16.mxu0 0
        %386 = vmatpush1.bf16.msra.mxu0 0
        %387 = vmatprep.subr.bf16.mxu0 0
        %388 = vmatpush1.bf16.msra.mxu0 0
        %389 = vmatprep.subr.bf16.mxu0 0
        %390 = vmatpush1.bf16.msra.mxu0 0
        %391 = vmatprep.subr.bf16.mxu0 0
        %392 = vmatpush1.bf16.msra.mxu0 0
        %393 = vmatprep.subr.bf16.mxu0 0
        %394 = vmatpush1.bf16.msra.mxu0 0
        %395 = vmatprep.subr.bf16.mxu0 0
        %396 = vmatpush1.bf16.msra.mxu0 0
        %397 = vmatprep.subr.bf16.mxu0 0
        %398 = vmatpush1.bf16.msra.mxu0 0
        %399 = vmatprep.subr.bf16.mxu0 0
        %400 = vmatpush1.bf16.msra.mxu0 0
        %401 = vmatprep.mubr.bf16.mxu0 0
        %402 = vmatmul.mubr.bf16.gmra.mrb[0].mxu0 %v346
        %v403 = vpop.f32.mrb[0].mxu0
        %v404 = vadd.f32 %v318, %v403
        %v405 = vpop.f32.mrb[0].mxu0
        %v406 = vpop.f32.mrb[0].mxu0
        %v407 = vadd.f32 %v318, %v406
        %v408 = vpop.f32.mrb[0].mxu0
        %409 = vmatprep.mubr.bf16.mxu0 0
        %410 = vmatmul.mubr.bf16.gmra.mrb[0].mxu0 %v349
        %v411 = vpop.f32.mrb[0].mxu0
        %v412 = vadd.f32 %v318, %v411
        %v413 = vpop.f32.mrb[0].mxu0
        %v414 = vpop.f32.mrb[0].mxu0
        %v415 = vadd.f32 %v318, %v414
        %v416 = vpop.f32.mrb[0].mxu0
        %417 = vmatprep.mubr.bf16.mxu0 0
        %418 = vmatmul.mubr.bf16.gmra.mrb[0].mxu0 %v352
        %v419 = vpop.f32.mrb[0].mxu0
        %v420 = vadd.f32 %v318, %v419
        %v421 = vpop.f32.mrb[0].mxu0
        %v422 = vpop.f32.mrb[0].mxu0
        %v423 = vadd.f32 %v318, %v422
        %v424 = vpop.f32.mrb[0].mxu0
        %425 = vmatprep.mubr.bf16.mxu0 0
        %426 = vmatmul.mubr.bf16.gmra.mrb[0].mxu0 %v355
        %v427 = vpop.f32.mrb[0].mxu0
        %v428 = vadd.f32 %v318, %v427
        %v429 = vpop.f32.mrb[0].mxu0
        %v430 = vpop.f32.mrb[0].mxu0
        %v431 = vadd.f32 %v318, %v430
        %v432 = vpop.f32.mrb[0].mxu0
        %433 = vmatprep.mubr.bf16.mxu0 0
        %434 = vmatmul.mubr.bf16.gmra.mrb[0].mxu0 %v358
        %v435 = vpop.f32.mrb[0].mxu0
        %v436 = vadd.f32 %v318, %v435
        %v437 = vpop.f32.mrb[0].mxu0
        %v438 = vpop.f32.mrb[0].mxu0
        %v439 = vadd.f32 %v318, %v438
        %v440 = vpop.f32.mrb[0].mxu0
        %441 = vmatprep.mubr.bf16.mxu0 0
        %442 = vmatmul.mubr.bf16.gmra.mrb[0].mxu0 %v361
        %v443 = vpop.f32.mrb[0].mxu0
        %v444 = vadd.f32 %v318, %v443
        %v445 = vpop.f32.mrb[0].mxu0
        %v446 = vpop.f32.mrb[0].mxu0
        %v447 = vadd.f32 %v318, %v446
        %v448 = vpop.f32.mrb[0].mxu0
        %449 = vmatprep.mubr.bf16.mxu0 0
        %450 = vmatmul.mubr.bf16.gmra.mrb[0].mxu0 %v364
        %v451 = vpop.f32.mrb[0].mxu0
        %v452 = vadd.f32 %v318, %v451
        %v453 = vpop.f32.mrb[0].mxu0
        %v454 = vpop.f32.mrb[0].mxu0
        %v455 = vadd.f32 %v318, %v454
        %v456 = vpop.f32.mrb[0].mxu0
        %457 = vmatprep.mubr.bf16.mxu0 0
        %458 = vmatmul.mubr.bf16.gmra.mrb[0].mxu0 %v367
        %v459 = vpop.f32.mrb[0].mxu0
        %v460 = vadd.f32 %v318, %v459
        %v461 = vpop.f32.mrb[0].mxu0
        %v462 = vpop.f32.mrb[0].mxu0
        %v463 = vadd.f32 %v318, %v462
        %v464 = vpop.f32.mrb[0].mxu0
        %465 = vdwg.mxu0
        %v466 = vmax.f32 %v404, 0.0
        %v467 = vmax.f32 %v407, 0.0
        %v468 = vmax.f32 %v412, 0.0
        %v469 = vmax.f32 %v415, 0.0
        %v470 = vmax.f32 %v420, 0.0
        %v471 = vmax.f32 %v423, 0.0
        %v472 = vmax.f32 %v428, 0.0
        %v473 = vmax.f32 %v431, 0.0
        %v474 = vmax.f32 %v436, 0.0
        %v475 = vmax.f32 %v439, 0.0
        %v476 = vmax.f32 %v444, 0.0
        %v477 = vmax.f32 %v447, 0.0
        %v478 = vmax.f32 %v452, 0.0
        %v479 = vmax.f32 %v455, 0.0
        %v480 = vmax.f32 %v460, 0.0
        %v481 = vmax.f32 %v463, 0.0
        %v482 = vpack.c.bf16 %v467, %v466
        %v483 = vpack.c.bf16 %v469, %v468
        %v484 = vpack.c.bf16 %v471, %v470
        %v485 = vpack.c.bf16 %v473, %v472
        %v486 = vpack.c.bf16 %v475, %v474
        %v487 = vpack.c.bf16 %v477, %v476
        %v488 = vpack.c.bf16 %v479, %v478
        %v489 = vpack.c.bf16 %v481, %v480
        %v490 = vld [vmem:[%s3] sm:$0xf]
        %v491 = vld [vmem:[%s3 + $0x4] sm:$0xf]
        %v492 = vld [vmem:[%s3 + $0x8] sm:$0xf]
        %v493 = vld [vmem:[%s3 + $0xc] sm:$0xf]
        %v494 = vld [vmem:[%s3 + $0x10] sm:$0xf]
        %v495 = vld [vmem:[%s3 + $0x14] sm:$0xf]
        %v496 = vld [vmem:[%s3 + $0x18] sm:$0xf]
        %v497 = vld [vmem:[%s3 + $0x1c] sm:$0xf]
        %v498 = vld [vmem:[%s3 + $0x20] sm:$0xf]
        %v499 = vld [vmem:[%s3 + $0x24] sm:$0xf]
        %v500 = vld [vmem:[%s3 + $0x28] sm:$0xf]
        %v501 = vld [vmem:[%s3 + $0x2c] sm:$0xf]
        %v502 = vld [vmem:[%s3 + $0x30] sm:$0xf]
        %v503 = vld [vmem:[%s3 + $0x34] sm:$0xf]
        %v504 = vld [vmem:[%s3 + $0x38] sm:$0xf]
        %v505 = vld [vmem:[%s3 + $0x3c] sm:$0xf]
        %v506 = vld [vmem:[%s4] sm:$0x1]
        %v508 = vlaneseq
        %v509 = vshrl.u32 %v508, 7
        %v510 = vsub.s32 0, %v509
        %v511 = vrot.slane %v506, %v510
        %v529 = vunpack.c.l.b16 %v490
        %v530 = vunpack.c.l.b16 %v491
        %v531 = vunpack.c.l.b16 %v492
        %v532 = vunpack.c.l.b16 %v493
        %v533 = vunpack.c.l.b16 %v494
        %v534 = vunpack.c.l.b16 %v495
        %v535 = vunpack.c.l.b16 %v496
        %v536 = vunpack.c.l.b16 %v497
        %v537 = vunpack.c.l.b16 %v498
        %v538 = vunpack.c.l.b16 %v499
        %v539 = vunpack.c.l.b16 %v500
        %v540 = vunpack.c.l.b16 %v501
        %v541 = vunpack.c.l.b16 %v502
        %v542 = vunpack.c.l.b16 %v503
        %v543 = vunpack.c.l.b16 %v504
        %v544 = vunpack.c.l.b16 %v505
        %v545 = vpack.c.b16 %v530, %v529
        %v546 = vpack.c.b16 %v532, %v531
        %v547 = vpack.c.b16 %v534, %v533
        %v548 = vpack.c.b16 %v536, %v535
        %v549 = vpack.c.b16 %v538, %v537
        %v550 = vpack.c.b16 %v540, %v539
        %v551 = vpack.c.b16 %v542, %v541
        %v552 = vpack.c.b16 %v544, %v543
        %561 = vmatprep.subr.bf16.mxu0 0
        %562 = vmatpush1.bf16.msra.mxu0 %v545
        %563 = vmatprep.subr.bf16.mxu0 0
        %564 = vmatpush1.bf16.msra.mxu0 %v546
        %565 = vmatprep.subr.bf16.mxu0 0
        %566 = vmatpush1.bf16.msra.mxu0 %v547
        %567 = vmatprep.subr.bf16.mxu0 0
        %568 = vmatpush1.bf16.msra.mxu0 %v548
        %569 = vmatprep.subr.bf16.mxu0 0
        %570 = vmatpush1.bf16.msra.mxu0 %v549
        %571 = vmatprep.subr.bf16.mxu0 0
        %572 = vmatpush1.bf16.msra.mxu0 %v550
        %573 = vmatprep.subr.bf16.mxu0 0
        %574 = vmatpush1.bf16.msra.mxu0 %v551
        %575 = vmatprep.subr.bf16.mxu0 0
        %576 = vmatpush1.bf16.msra.mxu0 %v552
        %577 = vmatprep.subr.bf16.mxu0 0
        %578 = vmatpush1.bf16.msra.mxu0 0
        %579 = vmatprep.subr.bf16.mxu0 0
        %580 = vmatpush1.bf16.msra.mxu0 0
        %581 = vmatprep.subr.bf16.mxu0 0
        %582 = vmatpush1.bf16.msra.mxu0 0
        %583 = vmatprep.subr.bf16.mxu0 0
        %584 = vmatpush1.bf16.msra.mxu0 0
        %585 = vmatprep.subr.bf16.mxu0 0
        %586 = vmatpush1.bf16.msra.mxu0 0
        %587 = vmatprep.subr.bf16.mxu0 0
        %588 = vmatpush1.bf16.msra.mxu0 0
        %589 = vmatprep.subr.bf16.mxu0 0
        %590 = vmatpush1.bf16.msra.mxu0 0
        %591 = vmatprep.subr.bf16.mxu0 0
        %592 = vmatpush1.bf16.msra.mxu0 0
        %593 = vmatprep.mubr.bf16.mxu0 0
        %594 = vmatmul.mubr.bf16.gmra.mrb[0].mxu0 %v482
        %v595 = vpop.f32.mrb[0].mxu0
        %v596 = vadd.f32 %v511, %v595
        %v597 = vpop.f32.mrb[0].mxu0
        %v598 = vpop.f32.mrb[0].mxu0
        %v599 = vadd.f32 %v511, %v598
        %v600 = vpop.f32.mrb[0].mxu0
        %601 = vmatprep.mubr.bf16.mxu0 0
        %602 = vmatmul.mubr.bf16.gmra.mrb[0].mxu0 %v483
        %v603 = vpop.f32.mrb[0].mxu0
        %v604 = vadd.f32 %v511, %v603
        %v605 = vpop.f32.mrb[0].mxu0
        %v606 = vpop.f32.mrb[0].mxu0
        %v607 = vadd.f32 %v511, %v606
        %v608 = vpop.f32.mrb[0].mxu0
        %609 = vmatprep.mubr.bf16.mxu0 0
        %610 = vmatmul.mubr.bf16.gmra.mrb[0].mxu0 %v484
        %v611 = vpop.f32.mrb[0].mxu0
        %v612 = vadd.f32 %v511, %v611
        %v613 = vpop.f32.mrb[0].mxu0
        %v614 = vpop.f32.mrb[0].mxu0
        %v615 = vadd.f32 %v511, %v614
        %v616 = vpop.f32.mrb[0].mxu0
        %617 = vmatprep.mubr.bf16.mxu0 0
        %618 = vmatmul.mubr.bf16.gmra.mrb[0].mxu0 %v485
        %v619 = vpop.f32.mrb[0].mxu0
        %v620 = vadd.f32 %v511, %v619
        %v621 = vpop.f32.mrb[0].mxu0
        %v622 = vpop.f32.mrb[0].mxu0
        %v623 = vadd.f32 %v511, %v622
        %v624 = vpop.f32.mrb[0].mxu0
        %625 = vmatprep.mubr.bf16.mxu0 0
        %626 = vmatmul.mubr.bf16.gmra.mrb[0].mxu0 %v486
        %v627 = vpop.f32.mrb[0].mxu0
        %v628 = vadd.f32 %v511, %v627
        %v629 = vpop.f32.mrb[0].mxu0
        %v630 = vpop.f32.mrb[0].mxu0
        %v631 = vadd.f32 %v511, %v630
        %v632 = vpop.f32.mrb[0].mxu0
        %633 = vmatprep.mubr.bf16.mxu0 0
        %634 = vmatmul.mubr.bf16.gmra.mrb[0].mxu0 %v487
        %v635 = vpop.f32.mrb[0].mxu0
        %v636 = vadd.f32 %v511, %v635
        %v637 = vpop.f32.mrb[0].mxu0
        %v638 = vpop.f32.mrb[0].mxu0
        %v639 = vadd.f32 %v511, %v638
        %v640 = vpop.f32.mrb[0].mxu0
        %641 = vmatprep.mubr.bf16.mxu0 0
        %642 = vmatmul.mubr.bf16.gmra.mrb[0].mxu0 %v488
        %v643 = vpop.f32.mrb[0].mxu0
        %v644 = vadd.f32 %v511, %v643
        %v645 = vpop.f32.mrb[0].mxu0
        %v646 = vpop.f32.mrb[0].mxu0
        %v647 = vadd.f32 %v511, %v646
        %v648 = vpop.f32.mrb[0].mxu0
        %649 = vmatprep.mubr.bf16.mxu0 0
        %650 = vmatmul.mubr.bf16.gmra.mrb[0].mxu0 %v489
        %v651 = vpop.f32.mrb[0].mxu0
        %v652 = vadd.f32 %v511, %v651
        %v653 = vpop.f32.mrb[0].mxu0
        %v654 = vpop.f32.mrb[0].mxu0
        %v655 = vadd.f32 %v511, %v654
        %v656 = vpop.f32.mrb[0].mxu0
        %657 = vdwg.mxu0
        %v658 = vmax.f32 %v596, 0.0
        %v659 = vmax.f32 %v599, 0.0
        %v660 = vmax.f32 %v604, 0.0
        %v661 = vmax.f32 %v607, 0.0
        %v662 = vmax.f32 %v612, 0.0
        %v663 = vmax.f32 %v615, 0.0
        %v664 = vmax.f32 %v620, 0.0
        %v665 = vmax.f32 %v623, 0.0
        %v666 = vmax.f32 %v628, 0.0
        %v667 = vmax.f32 %v631, 0.0
        %v668 = vmax.f32 %v636, 0.0
        %v669 = vmax.f32 %v639, 0.0
        %v670 = vmax.f32 %v644, 0.0
        %v671 = vmax.f32 %v647, 0.0
        %v672 = vmax.f32 %v652, 0.0
        %v673 = vmax.f32 %v655, 0.0
        %v674 = vpack.c.bf16 %v659, %v658
        %v675 = vpack.c.bf16 %v661, %v660
        %v676 = vpack.c.bf16 %v663, %v662
        %v677 = vpack.c.bf16 %v665, %v664
        %v678 = vpack.c.bf16 %v667, %v666
        %v679 = vpack.c.bf16 %v669, %v668
        %v680 = vpack.c.bf16 %v671, %v670
        %v681 = vpack.c.bf16 %v673, %v672
        %v682 = vld [vmem:[%s5] sm:$0xf]
        %v683 = vld [vmem:[%s5 + $0x4] sm:$0xf]
        %v684 = vld [vmem:[%s5 + $0x8] sm:$0xf]
        %v685 = vld [vmem:[%s5 + $0xc] sm:$0xf]
        %v686 = vld [vmem:[%s5 + $0x10] sm:$0xf]
        %v687 = vld [vmem:[%s5 + $0x14] sm:$0xf]
        %v688 = vld [vmem:[%s5 + $0x18] sm:$0xf]
        %v689 = vld [vmem:[%s5 + $0x1c] sm:$0xf]
        %v690 = vld [vmem:[%s5 + $0x20] sm:$0xf]
        %v691 = vld [vmem:[%s5 + $0x24] sm:$0xf]
        %v692 = vld [vmem:[%s5 + $0x28] sm:$0xf]
        %v693 = vld [vmem:[%s5 + $0x2c] sm:$0xf]
        %v694 = vld [vmem:[%s5 + $0x30] sm:$0xf]
        %v695 = vld [vmem:[%s5 + $0x34] sm:$0xf]
        %v696 = vld [vmem:[%s5 + $0x38] sm:$0xf]
        %v697 = vld [vmem:[%s5 + $0x3c] sm:$0xf]
        %v698 = vld [vmem:[%s6] sm:$0x1]
        %v700 = vlaneseq
        %v701 = vshrl.u32 %v700, 7
        %v702 = vsub.s32 0, %v701
        %v703 = vrot.slane %v698, %v702
        %v721 = vunpack.c.l.b16 %v682
        %v722 = vunpack.c.l.b16 %v683
        %v723 = vunpack.c.l.b16 %v684
        %v724 = vunpack.c.l.b16 %v685
        %v725 = vunpack.c.l.b16 %v686
        %v726 = vunpack.c.l.b16 %v687
        %v727 = vunpack.c.l.b16 %v688
        %v728 = vunpack.c.l.b16 %v689
        %v729 = vunpack.c.l.b16 %v690
        %v730 = vunpack.c.l.b16 %v691
        %v731 = vunpack.c.l.b16 %v692
        %v732 = vunpack.c.l.b16 %v693
        %v733 = vunpack.c.l.b16 %v694
        %v734 = vunpack.c.l.b16 %v695
        %v735 = vunpack.c.l.b16 %v696
        %v736 = vunpack.c.l.b16 %v697
        %v737 = vpack.c.b16 %v722, %v721
        %v738 = vpack.c.b16 %v724, %v723
        %v739 = vpack.c.b16 %v726, %v725
        %v740 = vpack.c.b16 %v728, %v727
        %v741 = vpack.c.b16 %v730, %v729
        %v742 = vpack.c.b16 %v732, %v731
        %v743 = vpack.c.b16 %v734, %v733
        %v744 = vpack.c.b16 %v736, %v735
        %753 = vmatprep.subr.bf16.mxu0 0
        %754 = vmatpush1.bf16.msra.mxu0 %v737
        %755 = vmatprep.subr.bf16.mxu0 0
        %756 = vmatpush1.bf16.msra.mxu0 %v738
        %757 = vmatprep.subr.bf16.mxu0 0
        %758 = vmatpush1.bf16.msra.mxu0 %v739
        %759 = vmatprep.subr.bf16.mxu0 0
        %760 = vmatpush1.bf16.msra.mxu0 %v740
        %761 = vmatprep.subr.bf16.mxu0 0
        %762 = vmatpush1.bf16.msra.mxu0 %v741
        %763 = vmatprep.subr.bf16.mxu0 0
        %764 = vmatpush1.bf16.msra.mxu0 %v742
        %765 = vmatprep.subr.bf16.mxu0 0
        %766 = vmatpush1.bf16.msra.mxu0 %v743
        %767 = vmatprep.subr.bf16.mxu0 0
        %768 = vmatpush1.bf16.msra.mxu0 %v744
        %769 = vmatprep.subr.bf16.mxu0 0
        %770 = vmatpush1.bf16.msra.mxu0 0
        %771 = vmatprep.subr.bf16.mxu0 0
        %772 = vmatpush1.bf16.msra.mxu0 0
        %773 = vmatprep.subr.bf16.mxu0 0
        %774 = vmatpush1.bf16.msra.mxu0 0
        %775 = vmatprep.subr.bf16.mxu0 0
        %776 = vmatpush1.bf16.msra.mxu0 0
        %777 = vmatprep.subr.bf16.mxu0 0
        %778 = vmatpush1.bf16.msra.mxu0 0
        %779 = vmatprep.subr.bf16.mxu0 0
        %780 = vmatpush1.bf16.msra.mxu0 0
        %781 = vmatprep.subr.bf16.mxu0 0
        %782 = vmatpush1.bf16.msra.mxu0 0
        %783 = vmatprep.subr.bf16.mxu0 0
        %784 = vmatpush1.bf16.msra.mxu0 0
        %785 = vmatprep.mubr.bf16.mxu0 0
        %786 = vmatmul.mubr.bf16.gmra.mrb[0].mxu0 %v674
        %v787 = vpop.f32.mrb[0].mxu0
        %v788 = vadd.f32 %v703, %v787
        %v789 = vpop.f32.mrb[0].mxu0
        %v790 = vpop.f32.mrb[0].mxu0
        %v791 = vadd.f32 %v703, %v790
        %v792 = vpop.f32.mrb[0].mxu0
        %793 = vmatprep.mubr.bf16.mxu0 0
        %794 = vmatmul.mubr.bf16.gmra.mrb[0].mxu0 %v675
        %v795 = vpop.f32.mrb[0].mxu0
        %v796 = vadd.f32 %v703, %v795
        %v797 = vpop.f32.mrb[0].mxu0
        %v798 = vpop.f32.mrb[0].mxu0
        %v799 = vadd.f32 %v703, %v798
        %v800 = vpop.f32.mrb[0].mxu0
        %801 = vmatprep.mubr.bf16.mxu0 0
        %802 = vmatmul.mubr.bf16.gmra.mrb[0].mxu0 %v676
        %v803 = vpop.f32.mrb[0].mxu0
        %v804 = vadd.f32 %v703, %v803
        %v805 = vpop.f32.mrb[0].mxu0
        %v806 = vpop.f32.mrb[0].mxu0
        %v807 = vadd.f32 %v703, %v806
        %v808 = vpop.f32.mrb[0].mxu0
        %809 = vmatprep.mubr.bf16.mxu0 0
        %810 = vmatmul.mubr.bf16.gmra.mrb[0].mxu0 %v677
        %v811 = vpop.f32.mrb[0].mxu0
        %v812 = vadd.f32 %v703, %v811
        %v813 = vpop.f32.mrb[0].mxu0
        %v814 = vpop.f32.mrb[0].mxu0
        %v815 = vadd.f32 %v703, %v814
        %v816 = vpop.f32.mrb[0].mxu0
        %817 = vmatprep.mubr.bf16.mxu0 0
        %818 = vmatmul.mubr.bf16.gmra.mrb[0].mxu0 %v678
        %v819 = vpop.f32.mrb[0].mxu0
        %v820 = vadd.f32 %v703, %v819
        %v821 = vpop.f32.mrb[0].mxu0
        %v822 = vpop.f32.mrb[0].mxu0
        %v823 = vadd.f32 %v703, %v822
        %v824 = vpop.f32.mrb[0].mxu0
        %825 = vmatprep.mubr.bf16.mxu0 0
        %826 = vmatmul.mubr.bf16.gmra.mrb[0].mxu0 %v679
        %v827 = vpop.f32.mrb[0].mxu0
        %v828 = vadd.f32 %v703, %v827
        %v829 = vpop.f32.mrb[0].mxu0
        %v830 = vpop.f32.mrb[0].mxu0
        %v831 = vadd.f32 %v703, %v830
        %v832 = vpop.f32.mrb[0].mxu0
        %833 = vmatprep.mubr.bf16.mxu0 0
        %834 = vmatmul.mubr.bf16.gmra.mrb[0].mxu0 %v680
        %v835 = vpop.f32.mrb[0].mxu0
        %v836 = vadd.f32 %v703, %v835
        %v837 = vpop.f32.mrb[0].mxu0
        %v838 = vpop.f32.mrb[0].mxu0
        %v839 = vadd.f32 %v703, %v838
        %v840 = vpop.f32.mrb[0].mxu0
        %841 = vmatprep.mubr.bf16.mxu0 0
        %842 = vmatmul.mubr.bf16.gmra.mrb[0].mxu0 %v681
        %v843 = vpop.f32.mrb[0].mxu0
        %v844 = vadd.f32 %v703, %v843
        %v845 = vpop.f32.mrb[0].mxu0
        %v846 = vpop.f32.mrb[0].mxu0
        %v847 = vadd.f32 %v703, %v846
        %v848 = vpop.f32.mrb[0].mxu0
        %849 = vdwg.mxu0
        %v850 = vpack.c.bf16 %v791, %v788
        %v851 = vpack.c.bf16 %v799, %v796
        %v852 = vpack.c.bf16 %v807, %v804
        %v853 = vpack.c.bf16 %v815, %v812
        %v854 = vpack.c.bf16 %v823, %v820
        %v855 = vpack.c.bf16 %v831, %v828
        %v856 = vpack.c.bf16 %v839, %v836
        %v857 = vpack.c.bf16 %v847, %v844
        %v866 = vunpack.c.l.b16 %v850
        %v867 = vunpack.c.h.b16 %v850
        %v868 = vunpack.c.l.b16 %v851
        %v869 = vunpack.c.h.b16 %v851
        %v870 = vunpack.c.l.b16 %v852
        %v871 = vunpack.c.h.b16 %v852
        %v872 = vunpack.c.l.b16 %v853
        %v873 = vunpack.c.h.b16 %v853
        %v874 = vunpack.c.l.b16 %v854
        %v875 = vunpack.c.h.b16 %v854
        %v876 = vunpack.c.l.b16 %v855
        %v877 = vunpack.c.h.b16 %v855
        %v878 = vunpack.c.l.b16 %v856
        %v879 = vunpack.c.h.b16 %v856
        %v880 = vunpack.c.l.b16 %v857
        %v881 = vunpack.c.h.b16 %v857
        %v882 = vpack.c.b16 %v866, %v866
        %v883 = vpack.c.b16 %v867, %v867
        %v884 = vpack.c.b16 %v868, %v868
        %v885 = vpack.c.b16 %v869, %v869
        %v886 = vpack.c.b16 %v870, %v870
        %v887 = vpack.c.b16 %v871, %v871
        %v888 = vpack.c.b16 %v872, %v872
        %v889 = vpack.c.b16 %v873, %v873
        %v890 = vpack.c.b16 %v874, %v874
        %v891 = vpack.c.b16 %v875, %v875
        %v892 = vpack.c.b16 %v876, %v876
        %v893 = vpack.c.b16 %v877, %v877
        %v894 = vpack.c.b16 %v878, %v878
        %v895 = vpack.c.b16 %v879, %v879
        %v896 = vpack.c.b16 %v880, %v880
        %v897 = vpack.c.b16 %v881, %v881
        %914 = vst [vmem:[%s272] sm:$0xf] %v882
        %915 = vst [vmem:[%s272 + $0x4] sm:$0xf] %v883
        %916 = vst [vmem:[%s272 + $0x8] sm:$0xf] %v884
        %917 = vst [vmem:[%s272 + $0xc] sm:$0xf] %v885
        %918 = vst [vmem:[%s272 + $0x10] sm:$0xf] %v886
        %919 = vst [vmem:[%s272 + $0x14] sm:$0xf] %v887
        %920 = vst [vmem:[%s272 + $0x18] sm:$0xf] %v888
        %921 = vst [vmem:[%s272 + $0x1c] sm:$0xf] %v889
        %922 = vst [vmem:[%s272 + $0x20] sm:$0xf] %v890
        %923 = vst [vmem:[%s272 + $0x24] sm:$0xf] %v891
        %924 = vst [vmem:[%s272 + $0x28] sm:$0xf] %v892
        %925 = vst [vmem:[%s272 + $0x2c] sm:$0xf] %v893
        %926 = vst [vmem:[%s272 + $0x30] sm:$0xf] %v894
        %927 = vst [vmem:[%s272 + $0x34] sm:$0xf] %v895
        %928 = vst [vmem:[%s272 + $0x38] sm:$0xf] %v896
        %929 = vst [vmem:[%s272 + $0x3c] sm:$0xf] %v897
        %s930 = sand.u32 %s181, 1
        %s931 = scalar_lea.sflag [#allocation3], %s930
        %s932 = sand.u32 %s181, 1
        %s933 = smul.addr %s932, 64
        %s934 = scalar_lea.vmem [#allocation2], %s933
        // Predicated region
        $region49: #{tpu_custom_call.1} parent=47 // pred_check
          %p935 = pneg %p191
        $region50: #{tpu_custom_call.1} parent=47 // pred_check_branch
          %937 = sbr.rel (%p935) target = $region52
        $region51: #{tpu_custom_call.1} parent=47 // pred_region
          %s938 = smul.u32 16, %s21
          %s940 = ssub.s32 1024, 1024
          %941 = vsyncadd %s931, %s940
          %s942 = smul.addr %s938, 64
          %s943 = scalar_lea.hbm %s7, %s942
          %s944 = sshll.u32 %s934, 4
          %s945 = int_to_ptr.vmem [resolvable:$true] %s944
          %950 = dma.vmem_to_hbm [thread:$0]  %s945, 1024, %s943, %s931, 64, 64, 4
        $region52: #{tpu_custom_call.1} parent=47 // pred_fallthru
          _
      $region48: #{tpu_custom_call.1} parent=5 // pred_fallthru
        _
      %p951 = scmp.le.s32.totalorder 2, %s16
      // Predicated region
      $region53: #{tpu_custom_call.1} parent=5 // pred_check
        %p952 = pneg %p951
      $region54: #{tpu_custom_call.1} parent=5 // pred_check_branch
        %954 = sbr.rel (%p952) target = $region56
      $region55: #{tpu_custom_call.1} parent=5 // pred_region
        %s955 = ssub.s32 %s16, 2
        // Predicated region
        $region57: #{tpu_custom_call.1} parent=55 // pred_check
          %p956 = pneg %p197
        $region58: #{tpu_custom_call.1} parent=55 // pred_check_branch
          %958 = sbr.rel (%p956) target = $region60
        $region59: #{tpu_custom_call.1} parent=55 // pred_region
          %s959 = sand.u32 %s182, 1
          %s960 = scalar_lea.sflag [#allocation3], %s959
          %s961 = sand.u32 %s182, 1
          %s962 = smul.addr %s961, 64
          %s963 = scalar_lea.vmem [#allocation2], %s962
          %964 = dma.done %s960, 1024
        $region60: #{tpu_custom_call.1} parent=55 // pred_fallthru
          _
      $region56: #{tpu_custom_call.1} parent=5 // pred_fallthru
        _
    $region6: #{tpu_custom_call.1} parent=1 // loop_footer
      %s20 = sadd.s32 1, %s16
    $region7: #{tpu_custom_call.1} parent=1 // loop_footer_branch
      %15 = sbr.rel target = $region3
    $region8: #{tpu_custom_call.1} parent=1 // loop_exit
      _
    %965 = vsyncpa [#allocation3], 1
    %s966 = scalar_lea.sflag [#allocation3], 1
    %967 = vsyncpa %s966, 1

</llo_original>
